<compile_context>
chip_gen: v7x
topology: tpu7x:2x2x1
jax: 0.10.0
libtpu: 0.0.40
codegen_flags: <defaults>
</compile_context>

<pallas_src>
import numpy as np
import jax
import jax.numpy as jnp
from jax.experimental import pallas as pl
from jax.experimental.pallas import tpu as pltpu


def _round_up(x, m):
    return (x + m - 1) // m * m


# ---------------------------------------------------------------------------
# Fast path: "exactly one selected element per aligned pair" masks
# (checkerboard / RealNVP-style masks and their complements).
# ---------------------------------------------------------------------------
def _pair_select_kernel(x_even_ref, x_odd_ref, sel_ref, selc_ref, y_ref, yc_ref):
    # x_even_ref / x_odd_ref : [B, Pt]  even / odd element of each flat pair
    # sel_ref / selc_ref     : [1, Pt]  1 -> take the odd element, 0 -> even
    # y_ref / yc_ref         : [B, Pt]
    even = x_even_ref[...]
    odd = x_odd_ref[...]
    take_odd = sel_ref[...] != 0
    take_oddc = selc_ref[...] != 0
    # Pure VPU selects, bit-exact; x is read once and both outputs share it.
    y_ref[...] = jnp.where(take_odd, odd, even)
    yc_ref[...] = jnp.where(take_oddc, odd, even)


def _make_pair_forward(sel_np, selc_np):
    """Build a jitted forward for one-per-pair masks. All prep happens once."""
    p = int(sel_np.size)                       # number of pairs == K == Kc
    pt = min(2048, _round_up(p, 128))          # lane tile (>=128, lane dense)
    p_pad = _round_up(p, pt)                   # padded output width
    sel = jnp.asarray(
        np.pad(sel_np.astype(np.int32), (0, p_pad - p)).reshape(1, p_pad))
    selc = jnp.asarray(
        np.pad(selc_np.astype(np.int32), (0, p_pad - p)).reshape(1, p_pad))
    grid = (p_pad // pt,)

    def fwd(x_flat, sel_dev, selc_dev):
        b = x_flat.shape[0]
        # Layout plumbing (wrapper side): deinterleave flat pairs into two
        # lane-dense [B, P] planes.  Free reshape + strided slices in XLA.
        xp = x_flat.reshape(b, p, 2)
        x_even = xp[:, :, 0]
        x_odd = xp[:, :, 1]
        if p_pad != p:
            pad = ((0, 0), (0, p_pad - p))
            x_even = jnp.pad(x_even, pad)
            x_odd = jnp.pad(x_odd, pad)
        y, yc = pl.pallas_call(
            _pair_select_kernel,
            out_shape=(
                jax.ShapeDtypeStruct((b, p_pad), x_flat.dtype),
                jax.ShapeDtypeStruct((b, p_pad), x_flat.dtype),
            ),
            grid=grid,
            in_specs=[
                pl.BlockSpec((b, pt), lambda i: (0, i)),
                pl.BlockSpec((b, pt), lambda i: (0, i)),
                pl.BlockSpec((1, pt), lambda i: (0, i)),
                pl.BlockSpec((1, pt), lambda i: (0, i)),
            ],
            out_specs=(
                pl.BlockSpec((b, pt), lambda i: (0, i)),
                pl.BlockSpec((b, pt), lambda i: (0, i)),
            ),
            compiler_params=pltpu.CompilerParams(
                dimension_semantics=("parallel",)),
        )(x_even, x_odd, sel_dev, selc_dev)
        return y[:, :p], yc[:, :p]

    jitted = jax.jit(fwd)
    return lambda x_flat: jitted(x_flat, sel, selc)


# ---------------------------------------------------------------------------
# General fallback: arbitrary masks via a single fused one-hot matmul.
# (Not exercised by the demo; kept so arbitrary masks still work.)
# ---------------------------------------------------------------------------
def _select_matmul_kernel(x_ref, p_ref, y_ref):
    # y[b, j] = sum_n x[b, n] * onehot[n, j]  -- exact for 0/1 one-hot.
    y_ref[...] = jnp.dot(
        x_ref[...], p_ref[...].astype(x_ref.dtype),
        preferred_element_type=jnp.float32,
    ).astype(y_ref.dtype)


def _make_matmul_forward(mask_flat, maskc_flat):
    n = int(mask_flat.size)
    idx = np.nonzero(mask_flat)[0]
    idxc = np.nonzero(maskc_flat)[0]
    k, kc = int(idx.size), int(idxc.size)
    k_pad = max(_round_up(k, 128), 128)        # lane-dense, guards K == 0
    kc_pad = max(_round_up(kc, 128), 128)
    ktot = k_pad + kc_pad
    # One fused int8 selection matrix for BOTH masks (exact, 4x less traffic).
    onehot_np = np.zeros((n, ktot), dtype=np.int8)
    onehot_np[idx, np.arange(k)] = 1
    onehot_np[idxc, k_pad + np.arange(kc)] = 1
    onehot = jnp.asarray(onehot_np)            # uploaded once, at init
    kt = 128
    for cand in (512, 256, 128):
        if ktot % cand == 0:
            kt = cand
            break
    grid = (ktot // kt,)

    def fwd(x_flat, onehot_dev):
        b = x_flat.shape[0]
        y_all = pl.pallas_call(
            _select_matmul_kernel,
            out_shape=jax.ShapeDtypeStruct((b, ktot), x_flat.dtype),
            grid=grid,
            in_specs=[
                pl.BlockSpec((b, n), lambda i: (0, 0)),     # x stays resident
                pl.BlockSpec((n, kt), lambda i: (0, i)),    # column tiles
            ],
            out_specs=pl.BlockSpec((b, kt), lambda i: (0, i)),
            compiler_params=pltpu.CompilerParams(
                dimension_semantics=("parallel",)),
        )(x_flat, onehot_dev)
        return y_all[:, :k], y_all[:, k_pad:k_pad + kc]

    jitted = jax.jit(fwd)
    return lambda x_flat: jitted(x_flat, onehot)


# ---------------------------------------------------------------------------
# Module wrapper (mirrors the PyTorch Mask module; buffers fixed at init).
# ---------------------------------------------------------------------------
class MaskPallas:
    """JAX/Pallas equivalent of the PyTorch `Mask` module (forward only)."""

    def __init__(self, mask, mask_):
        mask = np.asarray(mask).astype(bool)
        mask_ = np.asarray(mask_).astype(bool)
        assert mask.shape == mask_.shape
        self.mask_shape = mask.shape
        mflat = mask.reshape(-1)
        mcflat = mask_.reshape(-1)
        n = mflat.size

        pair_ok = False
        if n % 2 == 0:
            mp = mflat.reshape(-1, 2)
            mcp = mcflat.reshape(-1, 2)
            pair_ok = bool((mp.sum(axis=1) == 1).all()
                           and (mcp.sum(axis=1) == 1).all())
        if pair_ok:
            # Checkerboard-style: selected element of pair p is even/odd slot.
            self._impl = _make_pair_forward(mp[:, 1], mcp[:, 1])
        else:
            # Arbitrary masks: fused, padded, column-tiled one-hot matmul.
            self._impl = _make_matmul_forward(mflat, mcflat)

    def forward(self, x, size=None):
        b = x.shape[0]
        # Masks are batch-broadcast buffers ([C,H,W]); per-batch masks with
        # varying True counts are not representable (same as torch .view).
        assert tuple(x.shape[1:]) == tuple(self.mask_shape)
        x_flat = x.reshape(b, -1)
        y, yc = self._impl(x_flat)
        if size is None:
            out_first = y.reshape(b, -1)
        else:
            out_first = y.reshape([-1] + list(size))
        return out_first, yc.reshape(b, -1)

    # TODO(synk): reverse() (masked_scatter_) is not implemented.


if __name__ == "__main__":
    # Small deterministic example: x is [B, C, H, W] = [2, 4, 16, 16].
    B, C, H, W = 2, 4, 16, 16
    key = jax.random.PRNGKey(0)
    x = jax.random.normal(key, (B, C, H, W), dtype=jnp.float32)

    # Deterministic checkerboard mask buffers (RealNVP-style) + complement.
    hh, ww = np.meshgrid(np.arange(H), np.arange(W), indexing="ij")
    checker = ((hh + ww) % 2 == 0)
    mask = np.broadcast_to(checker, (C, H, W)).copy()   # [C, H, W] bool
    mask_ = ~mask

    m = MaskPallas(mask, mask_)          # all static prep hoisted here
    y, y_ = m.forward(x)
    jax.block_until_ready((y, y_))

    # Cross-check against a NumPy reference of torch.masked_select semantics.
    x_np = np.asarray(x).reshape(B, -1)
    idx = np.nonzero(mask.reshape(-1))[0]
    idxc = np.nonzero(mask_.reshape(-1))[0]
    np.testing.assert_allclose(np.asarray(y), x_np[:, idx], rtol=0, atol=0)
    np.testing.assert_allclose(np.asarray(y_), x_np[:, idxc], rtol=0, atol=0)

    print("KERNEL_OK")
</pallas_src>

<mosaic_0001>
module attributes {stable_mosaic.version = 11 : i64} {
  func.func @_pair_select_kernel(%arg0: i32, %arg1: memref<2x512xf32, #tpu.memory_space<vmem>>, %arg2: memref<2x512xf32, #tpu.memory_space<vmem>>, %arg3: memref<1x512xi32, #tpu.memory_space<vmem>>, %arg4: memref<1x512xi32, #tpu.memory_space<vmem>>, %arg5: memref<2x512xf32, #tpu.memory_space<vmem>>, %arg6: memref<2x512xf32, #tpu.memory_space<vmem>>) attributes {dimension_semantics = [#tpu.dimension_semantics<parallel>], iteration_bounds = array<i64: 1>, scalar_prefetch = 0 : i64, scratch_operands = 0 : i64, tpu.core_type = #tpu.core_type<tc>, window_params = [{transform_indices = @transform_0, window_bounds = array<i64: 2, 512>}, {transform_indices = @transform_1, window_bounds = array<i64: 2, 512>}, {transform_indices = @transform_2, window_bounds = array<i64: 1, 512>}, {transform_indices = @transform_3, window_bounds = array<i64: 1, 512>}, {transform_indices = @transform_4, window_bounds = array<i64: 2, 512>}, {transform_indices = @transform_5, window_bounds = array<i64: 2, 512>}]} {
    %c0 = arith.constant 0 : index
    %c0_0 = arith.constant 0 : index
    %0 = vector.load %arg1[%c0, %c0_0] : memref<2x512xf32, #tpu.memory_space<vmem>>, vector<2x512xf32>
    %c0_1 = arith.constant 0 : index
    %c0_2 = arith.constant 0 : index
    %1 = vector.load %arg2[%c0_1, %c0_2] : memref<2x512xf32, #tpu.memory_space<vmem>>, vector<2x512xf32>
    %c0_3 = arith.constant 0 : index
    %c0_4 = arith.constant 0 : index
    %2 = vector.load %arg3[%c0_3, %c0_4] : memref<1x512xi32, #tpu.memory_space<vmem>>, vector<1x512xi32>
    %c0_i32 = arith.constant 0 : i32
    %3 = vector.broadcast %c0_i32 : i32 to vector<1x512xi32>
    %4 = arith.cmpi ne, %2, %3 : vector<1x512xi32>
    %c0_5 = arith.constant 0 : index
    %c0_6 = arith.constant 0 : index
    %5 = vector.load %arg4[%c0_5, %c0_6] : memref<1x512xi32, #tpu.memory_space<vmem>>, vector<1x512xi32>
    %c0_i32_7 = arith.constant 0 : i32
    %6 = vector.broadcast %c0_i32_7 : i32 to vector<1x512xi32>
    %7 = arith.cmpi ne, %5, %6 : vector<1x512xi32>
    %8 = vector.shape_cast %4 : vector<1x512xi1> to vector<1x512xi1>
    %9 = vector.broadcast %8 : vector<1x512xi1> to vector<2x512xi1>
    %10 = arith.select %9, %1, %0 : vector<2x512xi1>, vector<2x512xf32>
    %c0_8 = arith.constant 0 : index
    %c0_9 = arith.constant 0 : index
    %11 = vector.load %arg5[%c0_8, %c0_9] : memref<2x512xf32, #tpu.memory_space<vmem>>, vector<2x512xf32>
    tpu.vector_store %arg5[%c0_8, %c0_9], %10 {strides = array<i32>} : memref<2x512xf32, #tpu.memory_space<vmem>>, vector<2x512xf32>,
    %12 = vector.shape_cast %7 : vector<1x512xi1> to vector<1x512xi1>
    %13 = vector.broadcast %12 : vector<1x512xi1> to vector<2x512xi1>
    %14 = arith.select %13, %1, %0 : vector<2x512xi1>, vector<2x512xf32>
    %c0_10 = arith.constant 0 : index
    %c0_11 = arith.constant 0 : index
    %15 = vector.load %arg6[%c0_10, %c0_11] : memref<2x512xf32, #tpu.memory_space<vmem>>, vector<2x512xf32>
    tpu.vector_store %arg6[%c0_10, %c0_11], %14 {strides = array<i32>} : memref<2x512xf32, #tpu.memory_space<vmem>>, vector<2x512xf32>,
    return
  }
  func.func @transform_0(%arg0: i32) -> (i32, i32) {
    %c0_i32 = arith.constant 0 : i32
    %c0_i32_0 = arith.constant 0 : i32
    return %c0_i32, %arg0 : i32, i32
  }
  func.func @transform_1(%arg0: i32) -> (i32, i32) {
    %c0_i32 = arith.constant 0 : i32
    %c0_i32_0 = arith.constant 0 : i32
    return %c0_i32, %arg0 : i32, i32
  }
  func.func @transform_2(%arg0: i32) -> (i32, i32) {
    %c0_i32 = arith.constant 0 : i32
    %c0_i32_0 = arith.constant 0 : i32
    return %c0_i32, %arg0 : i32, i32
  }
  func.func @transform_3(%arg0: i32) -> (i32, i32) {
    %c0_i32 = arith.constant 0 : i32
    %c0_i32_0 = arith.constant 0 : i32
    return %c0_i32, %arg0 : i32, i32
  }
  func.func @transform_4(%arg0: i32) -> (i32, i32) {
    %c0_i32 = arith.constant 0 : i32
    %c0_i32_0 = arith.constant 0 : i32
    return %c0_i32, %arg0 : i32, i32
  }
  func.func @transform_5(%arg0: i32) -> (i32, i32) {
    %c0_i32 = arith.constant 0 : i32
    %c0_i32_0 = arith.constant 0 : i32
    return %c0_i32, %arg0 : i32, i32
  }
}

</mosaic_0001>

<llo_original>
// kernel: fwd.1
$region0: #{fwd.1}
  #allocation0 [shape = 'u32[]', space=smem, size = 0x4, offset = 0x4, fixed_abs, tag = 'smem constant byte address 0x4 - core index']
  #allocation1 [shape = 'u32[144,128]{1,0:T(1,128)}', space=vmem, size = 0x12000, scoped, tag = 'internal scratch']
  %s0 = inlined_call_operand.vmem [shape: f32[2,512], index: 0, kind: input, shape index: {}]
  %s1 = inlined_call_operand.vmem [shape: f32[2,512], index: 1, kind: input, shape index: {}]
  %s2 = inlined_call_operand.vmem [shape: s32[1,512], index: 2, kind: input, shape index: {}]
  %s3 = inlined_call_operand.vmem [shape: s32[1,512], index: 3, kind: input, shape index: {}]
  %s4 = inlined_call_operand.hbm [shape: f32[2,512], index: 4, kind: output, shape index: {0}]
  %s5 = inlined_call_operand.hbm [shape: f32[2,512], index: 5, kind: output, shape index: {1}]
  %6 = xla_tuple %s4, %s5
  %s7 = sld [smem:[#allocation0]]
  $region34: #{fwd.1} parent=0
    _
  %s9 = ssub.s32 1, %s7
  %s10 = scalar_select 0, %s9, %s7
  $region1: #{fwd.1} parent=0
    #allocation2 [shape = 'u8[4096]{0}', space=vmem, size = 0x1000, scoped, tag = 'output window, operand 0, single buffered']
    #allocation3 [shape = 's32[1]{0}', space=sflag, size = 0x4, scoped, tag = 'scoped memory for fwd.1']
    #allocation4 [shape = 'u8[4096]{0}', space=vmem, size = 0x1000, scoped, tag = 'output window, operand 1, single buffered']
    #allocation5 [shape = 's32[1]{0}', space=sflag, size = 0x4, scoped, tag = 'scoped memory for fwd.1']
    %11 = vsyncpa [#allocation3], 0
    %12 = vsyncpa [#allocation5], 0
    // Predicated region
    $region2: #{fwd.1} parent=1 // pred_check
      _
    $region3: #{fwd.1} parent=1 // pred_check_branch
      %14 = sbr.rel (0) target = $region5
    $region4: #{fwd.1} parent=1 // pred_region
      _
    $region5: #{fwd.1} parent=1 // pred_fallthru
      _
    // Predicated region
    $region6: #{fwd.1} parent=1 // pred_check
      _
    $region7: #{fwd.1} parent=1 // pred_check_branch
      %16 = sbr.rel (0) target = $region9
    $region8: #{fwd.1} parent=1 // pred_region
      _
    $region9: #{fwd.1} parent=1 // pred_fallthru
      _
    // Predicated region
    $region10: #{fwd.1} parent=1 // pred_check
      _
    $region11: #{fwd.1} parent=1 // pred_check_branch
      %18 = sbr.rel (0) target = $region13
    $region12: #{fwd.1} parent=1 // pred_region
      _
    $region13: #{fwd.1} parent=1 // pred_fallthru
      _
    // Predicated region
    $region14: #{fwd.1} parent=1 // pred_check
      _
    $region15: #{fwd.1} parent=1 // pred_check_branch
      %20 = sbr.rel (0) target = $region17
    $region16: #{fwd.1} parent=1 // pred_region
      _
    $region17: #{fwd.1} parent=1 // pred_fallthru
      _
    %v21 = vld [vmem:[%s0] sm:$0xff]
    %v22 = vld [vmem:[%s1] sm:$0xff]
    %v23 = vld [vmem:[%s2] sm:$0xf]
    %vm24 = vcmp.ne.s32.totalorder %v23, 0
    %v25 = vld [vmem:[%s3] sm:$0xf]
    %vm26 = vcmp.ne.s32.totalorder %v25, 0
    %v27 = vsel %vm24, 1, 0
    %v28 = vlaneseq
    %v29 = vshrl.u32 %v28, 7
    %v30 = vsub.s32 0, %v29
    %v31 = vrot.slane %v27, %v30
    %v32 = vlaneseq
    %v33 = vshrl.u32 %v32, 7
    %v34 = vsub.s32 1, %v33
    %v35 = vrot.slane %v27, %v34
    %v36 = vlaneseq
    %v37 = vshrl.u32 %v36, 7
    %v38 = vsub.s32 2, %v37
    %v39 = vrot.slane %v27, %v38
    %v40 = vlaneseq
    %v41 = vshrl.u32 %v40, 7
    %v42 = vsub.s32 3, %v41
    %v43 = vrot.slane %v27, %v42
    %vm44 = vcmp.eq.s32.totalorder %v31, 1
    %vm45 = vcmp.eq.s32.totalorder %v35, 1
    %vm46 = vcmp.eq.s32.totalorder %v39, 1
    %vm47 = vcmp.eq.s32.totalorder %v43, 1
    %v49 = vcombine.high %v22, %v22
    %v51 = vunpack.c.l.s4 1983009808
    %v52 = vunpack.c.0.s8 %v51
    %v53 = vlaneseq
    %v54 = vshrl.u32 %v53, 7
    %v55 = vsub.s32 %v52, %v54
    %v56 = vrot.slane %v22, %v55
    %v58 = vunpack.c.l.s4 1983009808
    %v59 = vunpack.c.0.s8 %v58
    %v60 = vlaneseq
    %v61 = vshrl.u32 %v60, 7
    %v62 = vsub.s32 %v59, %v61
    %v63 = vrot.slane %v49, %v62
    %v64 = vcombine.high %v56, %v56
    %v65 = vcombine.high %v63, %v63
    %v71 = vcombine.high %v21, %v21
    %v73 = vunpack.c.l.s4 1983009808
    %v74 = vunpack.c.0.s8 %v73
    %v75 = vlaneseq
    %v76 = vshrl.u32 %v75, 7
    %v77 = vsub.s32 %v74, %v76
    %v78 = vrot.slane %v21, %v77
    %v80 = vunpack.c.l.s4 1983009808
    %v81 = vunpack.c.0.s8 %v80
    %v82 = vlaneseq
    %v83 = vshrl.u32 %v82, 7
    %v84 = vsub.s32 %v81, %v83
    %v85 = vrot.slane %v71, %v84
    %v86 = vcombine.high %v78, %v78
    %v87 = vcombine.high %v85, %v85
    %v92 = vsel %vm44, %v56, %v78
    %v93 = vsel %vm45, %v64, %v86
    %v94 = vsel %vm46, %v63, %v85
    %v95 = vsel %vm47, %v65, %v87
    %v100 = vcombine.low %v92, %v93
    %v101 = vcombine.low %v94, %v95
    %v103 = vunpack.c.l.s4 1983009808
    %v104 = vunpack.c.0.s8 %v103
    %v105 = vlaneseq
    %v106 = vshrl.u32 %v105, 7
    %v107 = vsub.s32 %v104, %v106
    %v108 = vrot.slane %v100, %v107
    %v110 = vunpack.c.l.s4 1983009808
    %v111 = vunpack.c.0.s8 %v110
    %v112 = vlaneseq
    %v113 = vshrl.u32 %v112, 7
    %v114 = vsub.s32 %v111, %v113
    %v115 = vrot.slane %v101, %v114
    %v116 = vcombine.low %v108, %v115
    %118 = vst [vmem:[#allocation2] sm:$0xff] %v116
    %v119 = vsel %vm26, 1, 0
    %v120 = vlaneseq
    %v121 = vshrl.u32 %v120, 7
    %v122 = vsub.s32 0, %v121
    %v123 = vrot.slane %v119, %v122
    %v124 = vlaneseq
    %v125 = vshrl.u32 %v124, 7
    %v126 = vsub.s32 1, %v125
    %v127 = vrot.slane %v119, %v126
    %v128 = vlaneseq
    %v129 = vshrl.u32 %v128, 7
    %v130 = vsub.s32 2, %v129
    %v131 = vrot.slane %v119, %v130
    %v132 = vlaneseq
    %v133 = vshrl.u32 %v132, 7
    %v134 = vsub.s32 3, %v133
    %v135 = vrot.slane %v119, %v134
    %vm136 = vcmp.eq.s32.totalorder %v123, 1
    %vm137 = vcmp.eq.s32.totalorder %v127, 1
    %vm138 = vcmp.eq.s32.totalorder %v131, 1
    %vm139 = vcmp.eq.s32.totalorder %v135, 1
    %v140 = vsel %vm136, %v56, %v78
    %v141 = vsel %vm137, %v64, %v86
    %v142 = vsel %vm138, %v63, %v85
    %v143 = vsel %vm139, %v65, %v87
    %v148 = vcombine.low %v140, %v141
    %v149 = vcombine.low %v142, %v143
    %v151 = vunpack.c.l.s4 1983009808
    %v152 = vunpack.c.0.s8 %v151
    %v153 = vlaneseq
    %v154 = vshrl.u32 %v153, 7
    %v155 = vsub.s32 %v152, %v154
    %v156 = vrot.slane %v148, %v155
    %v158 = vunpack.c.l.s4 1983009808
    %v159 = vunpack.c.0.s8 %v158
    %v160 = vlaneseq
    %v161 = vshrl.u32 %v160, 7
    %v162 = vsub.s32 %v159, %v161
    %v163 = vrot.slane %v149, %v162
    %v164 = vcombine.low %v156, %v163
    %166 = vst [vmem:[#allocation4] sm:$0xff] %v164
    // Predicated region
    $region18: #{fwd.1} parent=1 // pred_check
      _
    $region19: #{fwd.1} parent=1 // pred_check_branch
      %168 = sbr.rel (0) target = $region21
    $region20: #{fwd.1} parent=1 // pred_region
      %s170 = ssub.s32 128, 128
      %171 = vsyncadd [#allocation3], %s170
      %s173 = sshll.u32 [#allocation2], 4
      %s174 = int_to_ptr.vmem [resolvable:$true] %s173
      %176 = dma.vmem_to_hbm [thread:$0]  %s174, 128, %s4, [#allocation3]
    $region21: #{fwd.1} parent=1 // pred_fallthru
      _
    // Predicated region
    $region22: #{fwd.1} parent=1 // pred_check
      _
    $region23: #{fwd.1} parent=1 // pred_check_branch
      %178 = sbr.rel (0) target = $region25
    $region24: #{fwd.1} parent=1 // pred_region
      %s180 = ssub.s32 128, 128
      %181 = vsyncadd [#allocation5], %s180
      %s183 = sshll.u32 [#allocation4], 4
      %s184 = int_to_ptr.vmem [resolvable:$true] %s183
      %186 = dma.vmem_to_hbm [thread:$0]  %s184, 128, %s5, [#allocation5]
    $region25: #{fwd.1} parent=1 // pred_fallthru
      _
    // Predicated region
    $region26: #{fwd.1} parent=1 // pred_check
      _
    $region27: #{fwd.1} parent=1 // pred_check_branch
      %188 = sbr.rel (0) target = $region29
    $region28: #{fwd.1} parent=1 // pred_region
      %189 = dma.done [#allocation3], 128
    $region29: #{fwd.1} parent=1 // pred_fallthru
      _
    // Predicated region
    $region30: #{fwd.1} parent=1 // pred_check
      _
    $region31: #{fwd.1} parent=1 // pred_check_branch
      %191 = sbr.rel (0) target = $region33
    $region32: #{fwd.1} parent=1 // pred_region
      %192 = dma.done [#allocation5], 128
    $region33: #{fwd.1} parent=1 // pred_fallthru
      _
    %193 = vsyncpa [#allocation3], 1
    %194 = vsyncpa [#allocation5], 1

</llo_original>
